<compile_context>
chip_gen: v7x
topology: tpu7x:2x2x1
jax: 0.10.0
libtpu: 0.0.40
codegen_flags: <defaults>
</compile_context>

<pallas_src>
import functools

import jax
import jax.numpy as jnp
from jax.experimental import pallas as pl
from jax.experimental.pallas import tpu as pltpu

IN_FEATURES = 784
HIDDEN = 64
NUM_CLASSES = 10
PADDED_CLASSES = 128  # lane-dense class axis (last dim multiple of 128)


def _mlp_logsoftmax_kernel(x_ref, w1_ref, w2_ref, o_ref):
    # x_ref:  (TB, 784)   flattened input tile
    # w1_ref: (784, 64)   fc1 weight, (in, out) layout, VMEM-resident
    # w2_ref: (64, 128)   fc2 weight, (in, out) layout, classes zero-padded to 128
    # o_ref:  (TB, 128)   log-probabilities in the first 10 lanes, -inf elsewhere
    x = x_ref[...]

    # fc1 (no bias) + sigmoid   -- MXU matmul, exp on the EUP
    h = jnp.dot(x, w1_ref[...], preferred_element_type=jnp.float32)
    h = 1.0 / (1.0 + jnp.exp(-h))

    # fc2 (no bias), full 128-wide MXU tile
    logits = jnp.dot(h, w2_ref[...], preferred_element_type=jnp.float32)

    # Mask the padded class columns to -inf so log_softmax ignores them.
    col = jax.lax.broadcasted_iota(jnp.int32, logits.shape, dimension=1)
    logits = jnp.where(col < NUM_CLASSES, logits, jnp.float32(-jnp.inf))

    # log_softmax over the class axis (PyTorch F.log_softmax default dim=1 for 2D)
    m = jnp.max(logits, axis=-1, keepdims=True)
    z = logits - m
    lse = jnp.log(jnp.sum(jnp.exp(z), axis=-1, keepdims=True))
    o_ref[...] = (z - lse).astype(o_ref.dtype)


def _round_up(n, m):
    return ((n + m - 1) // m) * m


def prepare_params(w1, w2):
    """One-time weight prep, hoisted out of the per-call path.

    w1: (64, 784)  PyTorch nn.Linear(784, 64).weight layout (out, in)
    w2: (10, 64)   PyTorch nn.Linear(64, 10).weight layout (out, in)
    returns w1t (784, 64) and w2t_pad (64, 128) with zero-padded class columns.
    """
    w1t = jnp.asarray(w1, jnp.float32).T                       # (784, 64)
    w2t = jnp.asarray(w2, jnp.float32).T                       # (64, 10)
    w2t_pad = jnp.pad(w2t, ((0, 0), (0, PADDED_CLASSES - NUM_CLASSES)))
    return w1t, w2t_pad


@functools.partial(jax.jit, static_argnames=("block_b",))
def net_forward_prepared(x_nchw, w1t, w2t_pad, block_b=2048):
    """Forward pass of Net using pre-transposed / pre-padded weights.

    x_nchw: (B, 1, 28, 28) float32 (or any shape whose trailing dims flatten to 784)
    returns (B, 10) float32 log-probabilities
    """
    x = jnp.asarray(x_nchw, jnp.float32).reshape(-1, IN_FEATURES)  # x.view(-1, 784)
    B = x.shape[0]

    # Batch tile: big enough to amortize per-step overhead, small enough that
    # 2 double-buffered (TB, 784) f32 tiles + weights fit v7x's 64 MiB VMEM.
    TB = min(block_b, _round_up(B, 8))
    Bp = _round_up(B, TB)                     # pad batch -> all tiles full/unmasked
    if Bp != B:
        x = jnp.pad(x, ((0, Bp - B), (0, 0)))

    cost = pl.CostEstimate(
        flops=2 * Bp * (IN_FEATURES * HIDDEN + HIDDEN * PADDED_CLASSES),
        transcendentals=Bp * (HIDDEN + PADDED_CLASSES),
        bytes_accessed=(Bp * IN_FEATURES * 4
                        + IN_FEATURES * HIDDEN * 4
                        + HIDDEN * PADDED_CLASSES * 4
                        + Bp * PADDED_CLASSES * 4),
    )

    out_pad = pl.pallas_call(
        _mlp_logsoftmax_kernel,
        out_shape=jax.ShapeDtypeStruct((Bp, PADDED_CLASSES), jnp.float32),
        grid=(Bp // TB,),
        in_specs=[
            pl.BlockSpec((TB, IN_FEATURES), lambda i: (i, 0)),
            pl.BlockSpec((IN_FEATURES, HIDDEN), lambda i: (0, 0)),
            pl.BlockSpec((HIDDEN, PADDED_CLASSES), lambda i: (0, 0)),
        ],
        out_specs=pl.BlockSpec((TB, PADDED_CLASSES), lambda i: (i, 0)),
        compiler_params=pltpu.CompilerParams(
            dimension_semantics=("parallel",),
            vmem_limit_bytes=48 * 1024 * 1024,
        ),
        cost_estimate=cost,
    )(x, w1t, w2t_pad)

    # Drop the padded batch rows and padded class lanes.
    return out_pad[:B, :NUM_CLASSES]


def net_forward(x_nchw, w1, w2):
    """Convenience wrapper matching the original PyTorch parameter layout."""
    w1t, w2t_pad = prepare_params(w1, w2)
    return net_forward_prepared(x_nchw, w1t, w2t_pad)


def _reference(x_nchw, w1, w2):
    x = x_nchw.reshape(-1, IN_FEATURES)
    h = jax.nn.sigmoid(x @ w1.T)
    logits = h @ w2.T
    return jax.nn.log_softmax(logits, axis=-1)


if __name__ == "__main__":
    key = jax.random.PRNGKey(0)
    kx, k1, k2 = jax.random.split(key, 3)

    # Small batch; feature sizes are fixed by the module (784 -> 64 -> 10).
    B = 2
    x = jax.random.normal(kx, (B, 1, 28, 28), dtype=jnp.float32)

    # Deterministic parameter init (PyTorch Linear layout: (out_features, in_features)).
    w1 = jax.random.uniform(k1, (HIDDEN, IN_FEATURES), dtype=jnp.float32,
                            minval=-1.0 / IN_FEATURES ** 0.5,
                            maxval=1.0 / IN_FEATURES ** 0.5)
    w2 = jax.random.uniform(k2, (NUM_CLASSES, HIDDEN), dtype=jnp.float32,
                            minval=-1.0 / HIDDEN ** 0.5,
                            maxval=1.0 / HIDDEN ** 0.5)

    # Weight transpose + class padding done once, outside the per-call path.
    w1t, w2t_pad = prepare_params(w1, w2)

    out = net_forward_prepared(x, w1t, w2t_pad)
    out = jax.block_until_ready(out)

    ref = _reference(x, w1, w2)
    assert out.shape == (B, NUM_CLASSES)
    assert jnp.allclose(out, ref, atol=1e-5, rtol=1e-5), \
        float(jnp.max(jnp.abs(out - ref)))

    print("KERNEL_OK")
</pallas_src>

<mosaic_0001>
module attributes {stable_mosaic.version = 11 : i64} {
  func.func @_mlp_logsoftmax_kernel(%arg0: i32, %arg1: memref<8x784xf32, #tpu.memory_space<vmem>>, %arg2: memref<784x64xf32, #tpu.memory_space<vmem>>, %arg3: memref<64x128xf32, #tpu.memory_space<vmem>>, %arg4: memref<8x128xf32, #tpu.memory_space<vmem>>) attributes {dimension_semantics = [#tpu.dimension_semantics<parallel>], iteration_bounds = array<i64: 1>, scalar_prefetch = 0 : i64, scratch_operands = 0 : i64, tpu.core_type = #tpu.core_type<tc>, window_params = [{transform_indices = @transform_0, window_bounds = array<i64: 8, 784>}, {pipeline_mode = #tpu.pipeline_mode<synchronous>, transform_indices = @transform_1, window_bounds = array<i64: 784, 64>}, {pipeline_mode = #tpu.pipeline_mode<synchronous>, transform_indices = @transform_2, window_bounds = array<i64: 64, 128>}, {transform_indices = @transform_3, window_bounds = array<i64: 8, 128>}]} {
    %c0 = arith.constant 0 : index
    %c0_0 = arith.constant 0 : index
    %0 = vector.load %arg1[%c0, %c0_0] : memref<8x784xf32, #tpu.memory_space<vmem>>, vector<8x784xf32>
    %c0_1 = arith.constant 0 : index
    %c0_2 = arith.constant 0 : index
    %1 = vector.load %arg2[%c0_1, %c0_2] : memref<784x64xf32, #tpu.memory_space<vmem>>, vector<784x64xf32>
    %cst = arith.constant dense<0.000000e+00> : vector<8x64xf32>
    %2 = tpu.matmul %0, %1, %cst {dimension_numbers = #tpu.dot_dimension_numbers<[1], [0], [0], [1], [0, 0, 1, 1], [], []>} : vector<8x784xf32>, vector<784x64xf32>, vector<8x64xf32> -> vector<8x64xf32>
    %cst_3 = arith.constant 0.000000e+00 : f32
    %3 = vector.broadcast %cst_3 : f32 to vector<8x64xf32>
    %4 = arith.subf %3, %2 : vector<8x64xf32>
    %5 = math.exp %4 : vector<8x64xf32>
    %cst_4 = arith.constant 1.000000e+00 : f32
    %6 = vector.broadcast %cst_4 : f32 to vector<8x64xf32>
    %7 = arith.addf %6, %5 : vector<8x64xf32>
    %cst_5 = arith.constant 1.000000e+00 : f32
    %8 = vector.broadcast %cst_5 : f32 to vector<8x64xf32>
    %9 = arith.divf %8, %7 : vector<8x64xf32>
    %c0_6 = arith.constant 0 : index
    %c0_7 = arith.constant 0 : index
    %10 = vector.load %arg3[%c0_6, %c0_7] : memref<64x128xf32, #tpu.memory_space<vmem>>, vector<64x128xf32>
    %cst_8 = arith.constant dense<0.000000e+00> : vector<8x128xf32>
    %11 = tpu.matmul %9, %10, %cst_8 {dimension_numbers = #tpu.dot_dimension_numbers<[1], [0], [0], [1], [0, 0, 1, 1], [], []>} : vector<8x64xf32>, vector<64x128xf32>, vector<8x128xf32> -> vector<8x128xf32>
    %12 = tpu.iota {dimensions = array<i32: 1>} : vector<8x128xi32>
    %c10_i32 = arith.constant 10 : i32
    %13 = vector.broadcast %c10_i32 : i32 to vector<8x128xi32>
    %14 = arith.cmpi slt, %12, %13 : vector<8x128xi32>
    %cst_9 = arith.constant 0xFF800000 : f32
    %15 = vector.broadcast %cst_9 : f32 to vector<8x128xf32>
    %16 = arith.select %14, %11, %15 : vector<8x128xi1>, vector<8x128xf32>
    %cst_10 = arith.constant dense<0xFF800000> : vector<8xf32>
    %17 = vector.multi_reduction <maximumf>, %16, %cst_10 [1] : vector<8x128xf32> to vector<8xf32>
    %18 = vector.shape_cast %17 : vector<8xf32> to vector<8x1xf32>
    %19 = vector.broadcast %18 : vector<8x1xf32> to vector<8x128xf32>
    %20 = arith.subf %16, %19 : vector<8x128xf32>
    %21 = math.exp %20 : vector<8x128xf32>
    %cst_11 = arith.constant dense<0.000000e+00> : vector<8xf32>
    %22 = vector.multi_reduction <add>, %21, %cst_11 [1] : vector<8x128xf32> to vector<8xf32>
    %23 = vector.shape_cast %22 : vector<8xf32> to vector<8x1xf32>
    %24 = math.log %23 : vector<8x1xf32>
    %25 = vector.broadcast %24 : vector<8x1xf32> to vector<8x128xf32>
    %26 = arith.subf %20, %25 : vector<8x128xf32>
    %c0_12 = arith.constant 0 : index
    %c0_13 = arith.constant 0 : index
    %27 = vector.load %arg4[%c0_12, %c0_13] : memref<8x128xf32, #tpu.memory_space<vmem>>, vector<8x128xf32>
    tpu.vector_store %arg4[%c0_12, %c0_13], %26 {strides = array<i32>} : memref<8x128xf32, #tpu.memory_space<vmem>>, vector<8x128xf32>,
    return
  }
  func.func @transform_0(%arg0: i32) -> (i32, i32) {
    %c0_i32 = arith.constant 0 : i32
    %c0_i32_0 = arith.constant 0 : i32
    return %arg0, %c0_i32 : i32, i32
  }
  func.func @transform_1(%arg0: i32) -> (i32, i32) {
    %c0_i32 = arith.constant 0 : i32
    %c0_i32_0 = arith.constant 0 : i32
    %c0_i32_1 = arith.constant 0 : i32
    return %c0_i32, %c0_i32_0 : i32, i32
  }
  func.func @transform_2(%arg0: i32) -> (i32, i32) {
    %c0_i32 = arith.constant 0 : i32
    %c0_i32_0 = arith.constant 0 : i32
    %c0_i32_1 = arith.constant 0 : i32
    return %c0_i32, %c0_i32_0 : i32, i32
  }
  func.func @transform_3(%arg0: i32) -> (i32, i32) {
    %c0_i32 = arith.constant 0 : i32
    %c0_i32_0 = arith.constant 0 : i32
    return %arg0, %c0_i32 : i32, i32
  }
}

</mosaic_0001>

<llo_original>
// kernel: net_forward_prepared.1
$region0: #{net_forward_prepared.1}
  #allocation0 [shape = 'u32[]', space=smem, size = 0x4, offset = 0x4, fixed_abs, tag = 'smem constant byte address 0x4 - core index']
  #allocation1 [shape = 'u32[144,128]{1,0:T(1,128)}', space=vmem, size = 0x12000, scoped, tag = 'internal scratch']
  %s0 = inlined_call_operand.vmem [shape: f32[8,784], index: 0, kind: input, shape index: {}]
  %s1 = inlined_call_operand.vmem [shape: f32[784,64], index: 1, kind: input, shape index: {}]
  %s2 = inlined_call_operand.vmem [shape: f32[64,128], index: 2, kind: input, shape index: {}]
  %s3 = inlined_call_operand.vmem [shape: f32[8,128], index: 3, kind: output, shape index: {}]
  %s4 = sld [smem:[#allocation0]]
  $region22: #{net_forward_prepared.1} parent=0
    _
  %s6 = ssub.s32 1, %s4
  %s7 = scalar_select 0, %s6, %s4
  // Predicated region
  $region2: #{net_forward_prepared.1} parent=0 // pred_check
    _
  $region3: #{net_forward_prepared.1} parent=0 // pred_check_branch
    %9 = sbr.rel (0) target = $region5
  $region4: #{net_forward_prepared.1} parent=0 // pred_region
    _
  $region5: #{net_forward_prepared.1} parent=0 // pred_fallthru
    _
  // Predicated region
  $region6: #{net_forward_prepared.1} parent=0 // pred_check
    _
  $region7: #{net_forward_prepared.1} parent=0 // pred_check_branch
    %11 = sbr.rel (0) target = $region9
  $region8: #{net_forward_prepared.1} parent=0 // pred_region
    _
  $region9: #{net_forward_prepared.1} parent=0 // pred_fallthru
    _
  // Predicated region
  $region10: #{net_forward_prepared.1} parent=0 // pred_check
    _
  $region11: #{net_forward_prepared.1} parent=0 // pred_check_branch
    %13 = sbr.rel (0) target = $region13
  $region12: #{net_forward_prepared.1} parent=0 // pred_region
    _
  $region13: #{net_forward_prepared.1} parent=0 // pred_fallthru
    _
  %v14 = vld [vmem:[%s0] sm:$0xff]
  %v15 = vld [vmem:[%s0 + $0x8] sm:$0xff]
  %v16 = vld [vmem:[%s0 + $0x10] sm:$0xff]
  %v17 = vld [vmem:[%s0 + $0x18] sm:$0xff]
  %v18 = vld [vmem:[%s0 + $0x20] sm:$0xff]
  %v19 = vld [vmem:[%s0 + $0x28] sm:$0xff]
  %v20 = vld [vmem:[%s0 + $0x30] sm:$0xff]
  %v21 = vld [vmem:[%s1] sm:$0xff]
  %v22 = vld [vmem:[%s1 + $0x8] sm:$0xff]
  %v23 = vld [vmem:[%s1 + $0x10] sm:$0xff]
  %v24 = vld [vmem:[%s1 + $0x18] sm:$0xff]
  %v25 = vld [vmem:[%s1 + $0x20] sm:$0xff]
  %v26 = vld [vmem:[%s1 + $0x28] sm:$0xff]
  %v27 = vld [vmem:[%s1 + $0x30] sm:$0xff]
  %v28 = vld [vmem:[%s1 + $0x38] sm:$0xff]
  %v29 = vld [vmem:[%s1 + $0x40] sm:$0xff]
  %v30 = vld [vmem:[%s1 + $0x48] sm:$0xff]
  %v31 = vld [vmem:[%s1 + $0x50] sm:$0xff]
  %v32 = vld [vmem:[%s1 + $0x58] sm:$0xff]
  %v33 = vld [vmem:[%s1 + $0x60] sm:$0xff]
  %v34 = vld [vmem:[%s1 + $0x68] sm:$0xff]
  %v35 = vld [vmem:[%s1 + $0x70] sm:$0xff]
  %v36 = vld [vmem:[%s1 + $0x78] sm:$0xff]
  %v37 = vld [vmem:[%s1 + $0x80] sm:$0xff]
  %v38 = vld [vmem:[%s1 + $0x88] sm:$0xff]
  %v39 = vld [vmem:[%s1 + $0x90] sm:$0xff]
  %v40 = vld [vmem:[%s1 + $0x98] sm:$0xff]
  %v41 = vld [vmem:[%s1 + $0xa0] sm:$0xff]
  %v42 = vld [vmem:[%s1 + $0xa8] sm:$0xff]
  %v43 = vld [vmem:[%s1 + $0xb0] sm:$0xff]
  %v44 = vld [vmem:[%s1 + $0xb8] sm:$0xff]
  %v45 = vld [vmem:[%s1 + $0xc0] sm:$0xff]
  %v46 = vld [vmem:[%s1 + $0xc8] sm:$0xff]
  %v47 = vld [vmem:[%s1 + $0xd0] sm:$0xff]
  %v48 = vld [vmem:[%s1 + $0xd8] sm:$0xff]
  %v49 = vld [vmem:[%s1 + $0xe0] sm:$0xff]
  %v50 = vld [vmem:[%s1 + $0xe8] sm:$0xff]
  %v51 = vld [vmem:[%s1 + $0xf0] sm:$0xff]
  %v52 = vld [vmem:[%s1 + $0xf8] sm:$0xff]
  %v53 = vld [vmem:[%s1 + $0x100] sm:$0xff]
  %v54 = vld [vmem:[%s1 + $0x108] sm:$0xff]
  %v55 = vld [vmem:[%s1 + $0x110] sm:$0xff]
  %v56 = vld [vmem:[%s1 + $0x118] sm:$0xff]
  %v57 = vld [vmem:[%s1 + $0x120] sm:$0xff]
  %v58 = vld [vmem:[%s1 + $0x128] sm:$0xff]
  %v59 = vld [vmem:[%s1 + $0x130] sm:$0xff]
  %v60 = vld [vmem:[%s1 + $0x138] sm:$0xff]
  %v61 = vld [vmem:[%s1 + $0x140] sm:$0xff]
  %v62 = vld [vmem:[%s1 + $0x148] sm:$0xff]
  %v63 = vld [vmem:[%s1 + $0x150] sm:$0xff]
  %v64 = vld [vmem:[%s1 + $0x158] sm:$0xff]
  %v65 = vld [vmem:[%s1 + $0x160] sm:$0xff]
  %v66 = vld [vmem:[%s1 + $0x168] sm:$0xff]
  %v67 = vld [vmem:[%s1 + $0x170] sm:$0xff]
  %v68 = vld [vmem:[%s1 + $0x178] sm:$0xff]
  %v69 = vld [vmem:[%s1 + $0x180] sm:$0xff]
  %v70 = vld [vmem:[%s1 + $0x188] sm:$0xff]
  %v71 = vld [vmem:[%s1 + $0x190] sm:$0xff]
  %v72 = vld [vmem:[%s1 + $0x198] sm:$0xff]
  %v73 = vld [vmem:[%s1 + $0x1a0] sm:$0xff]
  %v74 = vld [vmem:[%s1 + $0x1a8] sm:$0xff]
  %v75 = vld [vmem:[%s1 + $0x1b0] sm:$0xff]
  %v76 = vld [vmem:[%s1 + $0x1b8] sm:$0xff]
  %v77 = vld [vmem:[%s1 + $0x1c0] sm:$0xff]
  %v78 = vld [vmem:[%s1 + $0x1c8] sm:$0xff]
  %v79 = vld [vmem:[%s1 + $0x1d0] sm:$0xff]
  %v80 = vld [vmem:[%s1 + $0x1d8] sm:$0xff]
  %v81 = vld [vmem:[%s1 + $0x1e0] sm:$0xff]
  %v82 = vld [vmem:[%s1 + $0x1e8] sm:$0xff]
  %v83 = vld [vmem:[%s1 + $0x1f0] sm:$0xff]
  %v84 = vld [vmem:[%s1 + $0x1f8] sm:$0xff]
  %v85 = vld [vmem:[%s1 + $0x200] sm:$0xff]
  %v86 = vld [vmem:[%s1 + $0x208] sm:$0xff]
  %v87 = vld [vmem:[%s1 + $0x210] sm:$0xff]
  %v88 = vld [vmem:[%s1 + $0x218] sm:$0xff]
  %v89 = vld [vmem:[%s1 + $0x220] sm:$0xff]
  %v90 = vld [vmem:[%s1 + $0x228] sm:$0xff]
  %v91 = vld [vmem:[%s1 + $0x230] sm:$0xff]
  %v92 = vld [vmem:[%s1 + $0x238] sm:$0xff]
  %v93 = vld [vmem:[%s1 + $0x240] sm:$0xff]
  %v94 = vld [vmem:[%s1 + $0x248] sm:$0xff]
  %v95 = vld [vmem:[%s1 + $0x250] sm:$0xff]
  %v96 = vld [vmem:[%s1 + $0x258] sm:$0xff]
  %v97 = vld [vmem:[%s1 + $0x260] sm:$0xff]
  %v98 = vld [vmem:[%s1 + $0x268] sm:$0xff]
  %v99 = vld [vmem:[%s1 + $0x270] sm:$0xff]
  %v100 = vld [vmem:[%s1 + $0x278] sm:$0xff]
  %v101 = vld [vmem:[%s1 + $0x280] sm:$0xff]
  %v102 = vld [vmem:[%s1 + $0x288] sm:$0xff]
  %v103 = vld [vmem:[%s1 + $0x290] sm:$0xff]
  %v104 = vld [vmem:[%s1 + $0x298] sm:$0xff]
  %v105 = vld [vmem:[%s1 + $0x2a0] sm:$0xff]
  %v106 = vld [vmem:[%s1 + $0x2a8] sm:$0xff]
  %v107 = vld [vmem:[%s1 + $0x2b0] sm:$0xff]
  %v108 = vld [vmem:[%s1 + $0x2b8] sm:$0xff]
  %v109 = vld [vmem:[%s1 + $0x2c0] sm:$0xff]
  %v110 = vld [vmem:[%s1 + $0x2c8] sm:$0xff]
  %v111 = vld [vmem:[%s1 + $0x2d0] sm:$0xff]
  %v112 = vld [vmem:[%s1 + $0x2d8] sm:$0xff]
  %v113 = vld [vmem:[%s1 + $0x2e0] sm:$0xff]
  %v114 = vld [vmem:[%s1 + $0x2e8] sm:$0xff]
  %v115 = vld [vmem:[%s1 + $0x2f0] sm:$0xff]
  %v116 = vld [vmem:[%s1 + $0x2f8] sm:$0xff]
  %v117 = vld [vmem:[%s1 + $0x300] sm:$0xff]
  %v118 = vld [vmem:[%s1 + $0x308] sm:$0xff]
  %vm119 = vcmask 130048
  %v121 = vsel %vm119, %v20, 0
  %123 = vmatprep.subr.mxu0 0.0
  %124 = vmatpush1.msra.mxu0 %v21
  %125 = vmatprep.subr.mxu0 0.0
  %126 = vmatpush1.msra.mxu0 %v22
  %127 = vmatprep.subr.mxu0 0.0
  %128 = vmatpush1.msra.mxu0 %v23
  %129 = vmatprep.subr.mxu0 0.0
  %130 = vmatpush1.msra.mxu0 %v24
  %131 = vmatprep.subr.mxu0 0.0
  %132 = vmatpush1.msra.mxu0 %v25
  %133 = vmatprep.subr.mxu0 0.0
  %134 = vmatpush1.msra.mxu0 %v26
  %135 = vmatprep.subr.mxu0 0.0
  %136 = vmatpush1.msra.mxu0 %v27
  %137 = vmatprep.subr.mxu0 0.0
  %138 = vmatpush1.msra.mxu0 %v28
  %139 = vmatprep.subr.mxu0 0.0
  %140 = vmatpush1.msra.mxu0 %v29
  %141 = vmatprep.subr.mxu0 0.0
  %142 = vmatpush1.msra.mxu0 %v30
  %143 = vmatprep.subr.mxu0 0.0
  %144 = vmatpush1.msra.mxu0 %v31
  %145 = vmatprep.subr.mxu0 0.0
  %146 = vmatpush1.msra.mxu0 %v32
  %147 = vmatprep.subr.mxu0 0.0
  %148 = vmatpush1.msra.mxu0 %v33
  %149 = vmatprep.subr.mxu0 0.0
  %150 = vmatpush1.msra.mxu0 %v34
  %151 = vmatprep.subr.mxu0 0.0
  %152 = vmatpush1.msra.mxu0 %v35
  %153 = vmatprep.subr.mxu0 0.0
  %154 = vmatpush1.msra.mxu0 %v36
  %155 = vmatprep.subr.mxu0 0.0
  %156 = vmatpush1.msra.mxu0 %v37
  %157 = vmatprep.subr.mxu0 0.0
  %158 = vmatpush1.msra.mxu0 %v38
  %159 = vmatprep.subr.mxu0 0.0
  %160 = vmatpush1.msra.mxu0 %v39
  %161 = vmatprep.subr.mxu0 0.0
  %162 = vmatpush1.msra.mxu0 %v40
  %163 = vmatprep.subr.mxu0 0.0
  %164 = vmatpush1.msra.mxu0 %v41
  %165 = vmatprep.subr.mxu0 0.0
  %166 = vmatpush1.msra.mxu0 %v42
  %167 = vmatprep.subr.mxu0 0.0
  %168 = vmatpush1.msra.mxu0 %v43
  %169 = vmatprep.subr.mxu0 0.0
  %170 = vmatpush1.msra.mxu0 %v44
  %171 = vmatprep.subr.mxu0 0.0
  %172 = vmatpush1.msra.mxu0 %v45
  %173 = vmatprep.subr.mxu0 0.0
  %174 = vmatpush1.msra.mxu0 %v46
  %175 = vmatprep.subr.mxu0 0.0
  %176 = vmatpush1.msra.mxu0 %v47
  %177 = vmatprep.subr.mxu0 0.0
  %178 = vmatpush1.msra.mxu0 %v48
  %179 = vmatprep.subr.mxu0 0.0
  %180 = vmatpush1.msra.mxu0 %v49
  %181 = vmatprep.subr.mxu0 0.0
  %182 = vmatpush1.msra.mxu0 %v50
  %183 = vmatprep.subr.mxu0 0.0
  %184 = vmatpush1.msra.mxu0 %v51
  %185 = vmatprep.subr.mxu0 0.0
  %186 = vmatpush1.msra.mxu0 %v52
  %187 = vmatprep.mubr.f32.mxu0 %v15
  %188 = vmatmul.mubr.f32.gmra.mrb[0].mxu0 %v14
  %v189 = vpop.f32.mrb[0].mxu0
  %v190 = vadd.f32 0.0, %v189
  %v191 = vpop.f32.mrb[0].mxu0
  %192 = vdwg.mxu0
  %193 = vmatprep.subr.mxu0 0.0
  %194 = vmatpush1.msra.mxu0 %v53
  %195 = vmatprep.subr.mxu0 0.0
  %196 = vmatpush1.msra.mxu0 %v54
  %197 = vmatprep.subr.mxu0 0.0
  %198 = vmatpush1.msra.mxu0 %v55
  %199 = vmatprep.subr.mxu0 0.0
  %200 = vmatpush1.msra.mxu0 %v56
  %201 = vmatprep.subr.mxu0 0.0
  %202 = vmatpush1.msra.mxu0 %v57
  %203 = vmatprep.subr.mxu0 0.0
  %204 = vmatpush1.msra.mxu0 %v58
  %205 = vmatprep.subr.mxu0 0.0
  %206 = vmatpush1.msra.mxu0 %v59
  %207 = vmatprep.subr.mxu0 0.0
  %208 = vmatpush1.msra.mxu0 %v60
  %209 = vmatprep.subr.mxu0 0.0
  %210 = vmatpush1.msra.mxu0 %v61
  %211 = vmatprep.subr.mxu0 0.0
  %212 = vmatpush1.msra.mxu0 %v62
  %213 = vmatprep.subr.mxu0 0.0
  %214 = vmatpush1.msra.mxu0 %v63
  %215 = vmatprep.subr.mxu0 0.0
  %216 = vmatpush1.msra.mxu0 %v64
  %217 = vmatprep.subr.mxu0 0.0
  %218 = vmatpush1.msra.mxu0 %v65
  %219 = vmatprep.subr.mxu0 0.0
  %220 = vmatpush1.msra.mxu0 %v66
  %221 = vmatprep.subr.mxu0 0.0
  %222 = vmatpush1.msra.mxu0 %v67
  %223 = vmatprep.subr.mxu0 0.0
  %224 = vmatpush1.msra.mxu0 %v68
  %225 = vmatprep.subr.mxu0 0.0
  %226 = vmatpush1.msra.mxu0 %v69
  %227 = vmatprep.subr.mxu0 0.0
  %228 = vmatpush1.msra.mxu0 %v70
  %229 = vmatprep.subr.mxu0 0.0
  %230 = vmatpush1.msra.mxu0 %v71
  %231 = vmatprep.subr.mxu0 0.0
  %232 = vmatpush1.msra.mxu0 %v72
  %233 = vmatprep.subr.mxu0 0.0
  %234 = vmatpush1.msra.mxu0 %v73
  %235 = vmatprep.subr.mxu0 0.0
  %236 = vmatpush1.msra.mxu0 %v74
  %237 = vmatprep.subr.mxu0 0.0
  %238 = vmatpush1.msra.mxu0 %v75
  %239 = vmatprep.subr.mxu0 0.0
  %240 = vmatpush1.msra.mxu0 %v76
  %241 = vmatprep.subr.mxu0 0.0
  %242 = vmatpush1.msra.mxu0 %v77
  %243 = vmatprep.subr.mxu0 0.0
  %244 = vmatpush1.msra.mxu0 %v78
  %245 = vmatprep.subr.mxu0 0.0
  %246 = vmatpush1.msra.mxu0 %v79
  %247 = vmatprep.subr.mxu0 0.0
  %248 = vmatpush1.msra.mxu0 %v80
  %249 = vmatprep.subr.mxu0 0.0
  %250 = vmatpush1.msra.mxu0 %v81
  %251 = vmatprep.subr.mxu0 0.0
  %252 = vmatpush1.msra.mxu0 %v82
  %253 = vmatprep.subr.mxu0 0.0
  %254 = vmatpush1.msra.mxu0 %v83
  %255 = vmatprep.subr.mxu0 0.0
  %256 = vmatpush1.msra.mxu0 %v84
  %257 = vmatprep.mubr.f32.mxu0 %v17
  %258 = vmatmul.mubr.f32.gmra.mrb[0].mxu0 %v16
  %v259 = vpop.f32.mrb[0].mxu0
  %v260 = vadd.f32 %v190, %v259
  %v261 = vpop.f32.mrb[0].mxu0
  %262 = vdwg.mxu0
  %263 = vmatprep.subr.mxu0 0.0
  %264 = vmatpush1.msra.mxu0 %v85
  %265 = vmatprep.subr.mxu0 0.0
  %266 = vmatpush1.msra.mxu0 %v86
  %267 = vmatprep.subr.mxu0 0.0
  %268 = vmatpush1.msra.mxu0 %v87
  %269 = vmatprep.subr.mxu0 0.0
  %270 = vmatpush1.msra.mxu0 %v88
  %271 = vmatprep.subr.mxu0 0.0
  %272 = vmatpush1.msra.mxu0 %v89
  %273 = vmatprep.subr.mxu0 0.0
  %274 = vmatpush1.msra.mxu0 %v90
  %275 = vmatprep.subr.mxu0 0.0
  %276 = vmatpush1.msra.mxu0 %v91
  %277 = vmatprep.subr.mxu0 0.0
  %278 = vmatpush1.msra.mxu0 %v92
  %279 = vmatprep.subr.mxu0 0.0
  %280 = vmatpush1.msra.mxu0 %v93
  %281 = vmatprep.subr.mxu0 0.0
  %282 = vmatpush1.msra.mxu0 %v94
  %283 = vmatprep.subr.mxu0 0.0
  %284 = vmatpush1.msra.mxu0 %v95
  %285 = vmatprep.subr.mxu0 0.0
  %286 = vmatpush1.msra.mxu0 %v96
  %287 = vmatprep.subr.mxu0 0.0
  %288 = vmatpush1.msra.mxu0 %v97
  %289 = vmatprep.subr.mxu0 0.0
  %290 = vmatpush1.msra.mxu0 %v98
  %291 = vmatprep.subr.mxu0 0.0
  %292 = vmatpush1.msra.mxu0 %v99
  %293 = vmatprep.subr.mxu0 0.0
  %294 = vmatpush1.msra.mxu0 %v100
  %295 = vmatprep.subr.mxu0 0.0
  %296 = vmatpush1.msra.mxu0 %v101
  %297 = vmatprep.subr.mxu0 0.0
  %298 = vmatpush1.msra.mxu0 %v102
  %299 = vmatprep.subr.mxu0 0.0
  %300 = vmatpush1.msra.mxu0 %v103
  %301 = vmatprep.subr.mxu0 0.0
  %302 = vmatpush1.msra.mxu0 %v104
  %303 = vmatprep.subr.mxu0 0.0
  %304 = vmatpush1.msra.mxu0 %v105
  %305 = vmatprep.subr.mxu0 0.0
  %306 = vmatpush1.msra.mxu0 %v106
  %307 = vmatprep.subr.mxu0 0.0
  %308 = vmatpush1.msra.mxu0 %v107
  %309 = vmatprep.subr.mxu0 0.0
  %310 = vmatpush1.msra.mxu0 %v108
  %311 = vmatprep.subr.mxu0 0.0
  %312 = vmatpush1.msra.mxu0 %v109
  %313 = vmatprep.subr.mxu0 0.0
  %314 = vmatpush1.msra.mxu0 %v110
  %315 = vmatprep.subr.mxu0 0.0
  %316 = vmatpush1.msra.mxu0 %v111
  %317 = vmatprep.subr.mxu0 0.0
  %318 = vmatpush1.msra.mxu0 %v112
  %319 = vmatprep.subr.mxu0 0.0
  %320 = vmatpush1.msra.mxu0 %v113
  %321 = vmatprep.subr.mxu0 0.0
  %322 = vmatpush1.msra.mxu0 %v114
  %323 = vmatprep.subr.mxu0 0.0
  %324 = vmatpush1.msra.mxu0 %v115
  %325 = vmatprep.subr.mxu0 0.0
  %326 = vmatpush1.msra.mxu0 %v116
  %327 = vmatprep.mubr.f32.mxu0 %v19
  %328 = vmatmul.mubr.f32.gmra.mrb[0].mxu0 %v18
  %v329 = vpop.f32.mrb[0].mxu0
  %v330 = vadd.f32 %v260, %v329
  %v331 = vpop.f32.mrb[0].mxu0
  %332 = vdwg.mxu0
  %333 = vmatprep.subr.mxu0 0.0
  %334 = vmatpush1.msra.mxu0 %v117
  %335 = vmatprep.subr.mxu0 0.0
  %336 = vmatpush1.msra.mxu0 %v118
  %337 = vmatprep.subr.mxu0 0.0
  %338 = vmatpush1.msra.mxu0 0.0
  %339 = vmatprep.subr.mxu0 0.0
  %340 = vmatpush1.msra.mxu0 0.0
  %341 = vmatprep.subr.mxu0 0.0
  %342 = vmatpush1.msra.mxu0 0.0
  %343 = vmatprep.subr.mxu0 0.0
  %344 = vmatpush1.msra.mxu0 0.0
  %345 = vmatprep.subr.mxu0 0.0
  %346 = vmatpush1.msra.mxu0 0.0
  %347 = vmatprep.subr.mxu0 0.0
  %348 = vmatpush1.msra.mxu0 0.0
  %349 = vmatprep.subr.mxu0 0.0
  %350 = vmatpush1.msra.mxu0 0.0
  %351 = vmatprep.subr.mxu0 0.0
  %352 = vmatpush1.msra.mxu0 0.0
  %353 = vmatprep.subr.mxu0 0.0
  %354 = vmatpush1.msra.mxu0 0.0
  %355 = vmatprep.subr.mxu0 0.0
  %356 = vmatpush1.msra.mxu0 0.0
  %357 = vmatprep.subr.mxu0 0.0
  %358 = vmatpush1.msra.mxu0 0.0
  %359 = vmatprep.subr.mxu0 0.0
  %360 = vmatpush1.msra.mxu0 0.0
  %361 = vmatprep.subr.mxu0 0.0
  %362 = vmatpush1.msra.mxu0 0.0
  %363 = vmatprep.subr.mxu0 0.0
  %364 = vmatpush1.msra.mxu0 0.0
  %365 = vmatprep.subr.mxu0 0.0
  %366 = vmatpush1.msra.mxu0 0.0
  %367 = vmatprep.subr.mxu0 0.0
  %368 = vmatpush1.msra.mxu0 0.0
  %369 = vmatprep.subr.mxu0 0.0
  %370 = vmatpush1.msra.mxu0 0.0
  %371 = vmatprep.subr.mxu0 0.0
  %372 = vmatpush1.msra.mxu0 0.0
  %373 = vmatprep.subr.mxu0 0.0
  %374 = vmatpush1.msra.mxu0 0.0
  %375 = vmatprep.subr.mxu0 0.0
  %376 = vmatpush1.msra.mxu0 0.0
  %377 = vmatprep.subr.mxu0 0.0
  %378 = vmatpush1.msra.mxu0 0.0
  %379 = vmatprep.subr.mxu0 0.0
  %380 = vmatpush1.msra.mxu0 0.0
  %381 = vmatprep.subr.mxu0 0.0
  %382 = vmatpush1.msra.mxu0 0.0
  %383 = vmatprep.subr.mxu0 0.0
  %384 = vmatpush1.msra.mxu0 0.0
  %385 = vmatprep.subr.mxu0 0.0
  %386 = vmatpush1.msra.mxu0 0.0
  %387 = vmatprep.subr.mxu0 0.0
  %388 = vmatpush1.msra.mxu0 0.0
  %389 = vmatprep.subr.mxu0 0.0
  %390 = vmatpush1.msra.mxu0 0.0
  %391 = vmatprep.subr.mxu0 0.0
  %392 = vmatpush1.msra.mxu0 0.0
  %393 = vmatprep.subr.mxu0 0.0
  %394 = vmatpush1.msra.mxu0 0.0
  %395 = vmatprep.subr.mxu0 0.0
  %396 = vmatpush1.msra.mxu0 0.0
  %397 = vmatprep.mubr.f32.mxu0 0.0
  %398 = vmatmul.mubr.f32.gmra.mrb[0].mxu0 %v121
  %v399 = vpop.f32.mrb[0].mxu0
  %v400 = vadd.f32 %v330, %v399
  %v401 = vpop.f32.mrb[0].mxu0
  %402 = vdwg.mxu0
  %v403 = vsub.f32 0.0, %v400
  %v404 = vmul.f32 %v403, 1.442695
  %v405 = vpow.pop %v404
  %v406 = vadd.f32 %v405, 1.0
  %v407 = vrcp.pop %v406
  %v408 = vmul.f32 1.0, %v407
  %v409 = vld [vmem:[%s2] sm:$0xff]
  %v410 = vld [vmem:[%s2 + $0x8] sm:$0xff]
  %v411 = vld [vmem:[%s2 + $0x10] sm:$0xff]
  %v412 = vld [vmem:[%s2 + $0x18] sm:$0xff]
  %v413 = vld [vmem:[%s2 + $0x20] sm:$0xff]
  %v414 = vld [vmem:[%s2 + $0x28] sm:$0xff]
  %v415 = vld [vmem:[%s2 + $0x30] sm:$0xff]
  %v416 = vld [vmem:[%s2 + $0x38] sm:$0xff]
  %vm417 = vcmask 523264
  %v419 = vsel %vm417, %v408, 0
  %421 = vmatprep.subr.mxu0 0.0
  %422 = vmatpush1.msra.mxu0 %v409
  %423 = vmatprep.subr.mxu0 0.0
  %424 = vmatpush1.msra.mxu0 %v410
  %425 = vmatprep.subr.mxu0 0.0
  %426 = vmatpush1.msra.mxu0 %v411
  %427 = vmatprep.subr.mxu0 0.0
  %428 = vmatpush1.msra.mxu0 %v412
  %429 = vmatprep.subr.mxu0 0.0
  %430 = vmatpush1.msra.mxu0 %v413
  %431 = vmatprep.subr.mxu0 0.0
  %432 = vmatpush1.msra.mxu0 %v414
  %433 = vmatprep.subr.mxu0 0.0
  %434 = vmatpush1.msra.mxu0 %v415
  %435 = vmatprep.subr.mxu0 0.0
  %436 = vmatpush1.msra.mxu0 %v416
  %437 = vmatprep.subr.mxu0 0.0
  %438 = vmatpush1.msra.mxu0 0.0
  %439 = vmatprep.subr.mxu0 0.0
  %440 = vmatpush1.msra.mxu0 0.0
  %441 = vmatprep.subr.mxu0 0.0
  %442 = vmatpush1.msra.mxu0 0.0
  %443 = vmatprep.subr.mxu0 0.0
  %444 = vmatpush1.msra.mxu0 0.0
  %445 = vmatprep.subr.mxu0 0.0
  %446 = vmatpush1.msra.mxu0 0.0
  %447 = vmatprep.subr.mxu0 0.0
  %448 = vmatpush1.msra.mxu0 0.0
  %449 = vmatprep.subr.mxu0 0.0
  %450 = vmatpush1.msra.mxu0 0.0
  %451 = vmatprep.subr.mxu0 0.0
  %452 = vmatpush1.msra.mxu0 0.0
  %453 = vmatprep.subr.mxu0 0.0
  %454 = vmatpush1.msra.mxu0 0.0
  %455 = vmatprep.subr.mxu0 0.0
  %456 = vmatpush1.msra.mxu0 0.0
  %457 = vmatprep.subr.mxu0 0.0
  %458 = vmatpush1.msra.mxu0 0.0
  %459 = vmatprep.subr.mxu0 0.0
  %460 = vmatpush1.msra.mxu0 0.0
  %461 = vmatprep.subr.mxu0 0.0
  %462 = vmatpush1.msra.mxu0 0.0
  %463 = vmatprep.subr.mxu0 0.0
  %464 = vmatpush1.msra.mxu0 0.0
  %465 = vmatprep.subr.mxu0 0.0
  %466 = vmatpush1.msra.mxu0 0.0
  %467 = vmatprep.subr.mxu0 0.0
  %468 = vmatpush1.msra.mxu0 0.0
  %469 = vmatprep.subr.mxu0 0.0
  %470 = vmatpush1.msra.mxu0 0.0
  %471 = vmatprep.subr.mxu0 0.0
  %472 = vmatpush1.msra.mxu0 0.0
  %473 = vmatprep.subr.mxu0 0.0
  %474 = vmatpush1.msra.mxu0 0.0
  %475 = vmatprep.subr.mxu0 0.0
  %476 = vmatpush1.msra.mxu0 0.0
  %477 = vmatprep.subr.mxu0 0.0
  %478 = vmatpush1.msra.mxu0 0.0
  %479 = vmatprep.subr.mxu0 0.0
  %480 = vmatpush1.msra.mxu0 0.0
  %481 = vmatprep.subr.mxu0 0.0
  %482 = vmatpush1.msra.mxu0 0.0
  %483 = vmatprep.subr.mxu0 0.0
  %484 = vmatpush1.msra.mxu0 0.0
  %485 = vmatprep.mubr.f32.mxu0 0.0
  %486 = vmatmul.mubr.f32.gmra.mrb[0].mxu0 %v419
  %v487 = vpop.f32.mrb[0].mxu0
  %v488 = vadd.f32 0.0, %v487
  %v489 = vpop.f32.mrb[0].mxu0
  %490 = vdwg.mxu0
  %v491 = vlaneseq
  %v492 = vand.u32 %v491, 127
  %vm493 = vcmp.lt.s32.totalorder %v492, 10
  %v494 = vsel %vm493, %v488, -inf
  %495 = vmax.xlane.f32.xlu0 %v494
  %v496 = vpop.xlane.xlu0 %495
  %v497 = vsub.f32 %v494, %v496
  %v498 = vmul.f32 %v497, 1.442695
  %v499 = vpow.pop %v498
  %500 = vadd.xlane.f32.xlu0 %v499
  %v501 = vpop.xlane.xlu0 %500
  %v502 = vlog2.pop %v501
  %v503 = vmul.f32 %v502, 0.6931472
  %v504 = vsub.f32 %v497, %v503
  %505 = vst [vmem:[%s3] sm:$0xff] %v504
  // Predicated region
  $region14: #{net_forward_prepared.1} parent=0 // pred_check
    _
  $region15: #{net_forward_prepared.1} parent=0 // pred_check_branch
    %507 = sbr.rel (0) target = $region17
  $region16: #{net_forward_prepared.1} parent=0 // pred_region
    _
  $region17: #{net_forward_prepared.1} parent=0 // pred_fallthru
    _
  // Predicated region
  $region18: #{net_forward_prepared.1} parent=0 // pred_check
    _
  $region19: #{net_forward_prepared.1} parent=0 // pred_check_branch
    %509 = sbr.rel (0) target = $region21
  $region20: #{net_forward_prepared.1} parent=0 // pred_region
    _
  $region21: #{net_forward_prepared.1} parent=0 // pred_fallthru
    _

</llo_original>
